<compile_context>
chip_gen: v6e
topology: v6e:2x2x1
jax: 0.10.0
libtpu: 0.0.40
codegen_flags: <defaults>
</compile_context>

<pallas_src>
import functools

import jax
import jax.numpy as jnp
from jax.experimental import pallas as pl
from jax.experimental.pallas import tpu as pltpu


def _round_up(x: int, m: int) -> int:
    return (x + m - 1) // m * m


def dgm_lstm_kernel(xs_ref, w1_ref, wh_ref, b_ref, out_ref, *, kx, p):
    """One batch tile of the DGM-LSTM cell.

    xs_ref : (TB, K)  where K = kx + p, columns [0:kx] = X (padded),
                      columns [kx:kx+p] = S (padded).
    w1_ref : (K, 4P)  fused [[Uz Ug Ur Uh]; [Wz Wg Wr 0]]
    wh_ref : (P, P)   padded Wh
    b_ref  : (1, 4P)  fused [bz | bg | br | bh]
    out_ref: (TB, P)
    """
    XS = xs_ref[...]                              # native dtype, fed to MXU as-is
    S = XS[:, kx:kx + p].astype(jnp.float32)      # tile-aligned (kx, p % 128 == 0)

    # One lane-dense fused matmul for all four X/S pre-activations, f32 accumulate.
    slab = jnp.dot(XS, w1_ref[...], preferred_element_type=jnp.float32)
    slab = slab + b_ref[...].astype(jnp.float32)  # (TB, 4P)

    # Single wide tanh over the Z|G|R third of the slab (one EUP pass).
    zgr = jnp.tanh(slab[:, : 3 * p])
    Z = zgr[:, 0 * p:1 * p]
    G = zgr[:, 1 * p:2 * p]
    R = zgr[:, 2 * p:3 * p]

    # H gate: the last P columns of the slab already hold X @ Uh + bh.
    SR = (S * R).astype(wh_ref.dtype)
    pre_h = slab[:, 3 * p:] + jnp.dot(SR, wh_ref[...],
                                      preferred_element_type=jnp.float32)
    H = jnp.tanh(pre_h)

    S_new = (1.0 - G) * H + Z * S
    out_ref[...] = S_new.astype(out_ref.dtype)


@functools.partial(jax.jit, static_argnames=("batch_tile",))
def dgm_lstm_forward(S, X, params, *, batch_tile=256):
    """params: uz,ug,ur,uh (in_dim,out_dim); wz,wg,wr,wh (out_dim,out_dim);
    bz,bg,br,bh (1,out_dim). Returns S_new of shape (B, out_dim)."""
    B, out_dim = S.shape
    Bx, in_dim = X.shape
    assert Bx == B
    dtype = S.dtype

    # --- padded, MXU/lane-friendly geometry -------------------------------
    P = _round_up(max(out_dim, 1), 128)           # padded out_dim (lane-dense)
    Kx = _round_up(max(in_dim, 1), 128)           # padded in_dim
    K = Kx + P                                    # fused contraction dim (mult of 128)

    b_align = 8 if jnp.dtype(dtype).itemsize >= 4 else 16
    B_p = _round_up(B, b_align)
    if B_p <= batch_tile:
        TB = B_p
    else:
        TB = batch_tile
        B_p = _round_up(B_p, TB)
    num_btiles = B_p // TB

    # --- host-side packing: activations (fused under jit) -----------------
    Xp = jnp.zeros((B_p, Kx), dtype).at[:B, :in_dim].set(X.astype(dtype))
    Sp = jnp.zeros((B_p, P), dtype).at[:B, :out_dim].set(S)
    XS = jnp.concatenate([Xp, Sp], axis=1)        # (B_p, K)

    # --- host-side packing: fused weights / bias --------------------------
    def pad_u(u):
        return jnp.zeros((Kx, P), dtype).at[:in_dim, :out_dim].set(u.astype(dtype))

    def pad_w(w):
        return jnp.zeros((P, P), dtype).at[:out_dim, :out_dim].set(w.astype(dtype))

    def pad_b(b):
        return jnp.zeros((1, P), dtype).at[:, :out_dim].set(b.astype(dtype))

    u_blk = jnp.concatenate(
        [pad_u(params["uz"]), pad_u(params["ug"]),
         pad_u(params["ur"]), pad_u(params["uh"])], axis=1)          # (Kx, 4P)
    w_blk = jnp.concatenate(
        [pad_w(params["wz"]), pad_w(params["wg"]),
         pad_w(params["wr"]), jnp.zeros((P, P), dtype)], axis=1)     # (P, 4P)
    W1 = jnp.concatenate([u_blk, w_blk], axis=0)                     # (K, 4P)
    Wh = pad_w(params["wh"])                                         # (P, P)
    Ball = jnp.concatenate(
        [pad_b(params["bz"]), pad_b(params["bg"]),
         pad_b(params["br"]), pad_b(params["bh"])], axis=1)          # (1, 4P)

    # --- VMEM budget + cost estimate --------------------------------------
    itemsize = jnp.dtype(dtype).itemsize
    weight_bytes = (W1.size + Wh.size + Ball.size) * itemsize
    tile_bytes = (TB * K + TB * P) * itemsize
    vmem_limit = int(min(64 << 20, max(16 << 20,
                                       2 * (weight_bytes + tile_bytes) + (8 << 20))))

    cost = pl.CostEstimate(
        flops=2 * B_p * K * 4 * P + 2 * B_p * P * P,
        transcendentals=4 * B_p * P,
        bytes_accessed=(XS.size + W1.size + Wh.size + Ball.size + B_p * P) * itemsize,
    )

    kernel = functools.partial(dgm_lstm_kernel, kx=Kx, p=P)

    out_padded = pl.pallas_call(
        kernel,
        out_shape=jax.ShapeDtypeStruct((B_p, P), dtype),
        grid=(num_btiles,),
        in_specs=[
            pl.BlockSpec((TB, K), lambda i: (i, 0)),       # [X|S] batch tile
            pl.BlockSpec((K, 4 * P), lambda i: (0, 0)),    # fused W1 (resident)
            pl.BlockSpec((P, P), lambda i: (0, 0)),        # Wh     (resident)
            pl.BlockSpec((1, 4 * P), lambda i: (0, 0)),    # fused bias (resident)
        ],
        out_specs=pl.BlockSpec((TB, P), lambda i: (i, 0)),
        compiler_params=pltpu.CompilerParams(
            dimension_semantics=("parallel",),
            vmem_limit_bytes=vmem_limit,
        ),
        cost_estimate=cost,
    )(XS, W1, Wh, Ball)

    return out_padded[:B, :out_dim]


def init_params(key, in_dim, out_dim, dtype=jnp.float32):
    # Deterministic synthetic init (the torch module uses .random_(), an
    # uninitialized-style fill; we use small-scale normals instead).
    names_u = ["uz", "ug", "ur", "uh"]
    names_w = ["wz", "wg", "wr", "wh"]
    keys = jax.random.split(key, len(names_u) + len(names_w))
    params = {}
    for n, k in zip(names_u, keys[: len(names_u)]):
        params[n] = jax.random.normal(k, (in_dim, out_dim), dtype) * 0.1
    for n, k in zip(names_w, keys[len(names_u):]):
        params[n] = jax.random.normal(k, (out_dim, out_dim), dtype) * 0.1
    for n in ["bz", "bg", "br", "bh"]:
        params[n] = jnp.ones((1, out_dim), dtype)
    return params


def reference_forward(S, X, p):
    # Pure-JAX reference (mirrors the PyTorch forward exactly).
    Z = jnp.tanh(X @ p["uz"] + S @ p["wz"] + p["bz"])
    G = jnp.tanh(X @ p["ug"] + S @ p["wg"] + p["bg"])
    R = jnp.tanh(X @ p["ur"] + S @ p["wr"] + p["br"])
    H = jnp.tanh(X @ p["uh"] + (S * R) @ p["wh"] + p["bh"])
    return (1.0 - G) * H + Z * S


if __name__ == "__main__":
    B, in_dim, out_dim = 8, 4, 32
    key = jax.random.PRNGKey(0)
    k_s, k_x, k_p = jax.random.split(key, 3)

    S = jax.random.normal(k_s, (B, out_dim), jnp.float32)
    X = jax.random.normal(k_x, (B, in_dim), jnp.float32)
    params = init_params(k_p, in_dim, out_dim)

    out = dgm_lstm_forward(S, X, params)
    out = jax.block_until_ready(out)

    ref = reference_forward(S, X, params)
    assert out.shape == (B, out_dim)
    assert jnp.allclose(out, ref, atol=1e-4, rtol=1e-4), "mismatch vs reference"

    print("KERNEL_OK")
</pallas_src>

<mosaic_0001>
module attributes {stable_mosaic.version = 11 : i64} {
  func.func @dgm_lstm_kernel(%arg0: i32, %arg1: memref<8x256xf32, #tpu.memory_space<vmem>>, %arg2: memref<256x512xf32, #tpu.memory_space<vmem>>, %arg3: memref<128x128xf32, #tpu.memory_space<vmem>>, %arg4: memref<1x512xf32, #tpu.memory_space<vmem>>, %arg5: memref<8x128xf32, #tpu.memory_space<vmem>>) attributes {dimension_semantics = [#tpu.dimension_semantics<parallel>], iteration_bounds = array<i64: 1>, scalar_prefetch = 0 : i64, scratch_operands = 0 : i64, tpu.core_type = #tpu.core_type<tc>, window_params = [{transform_indices = @transform_0, window_bounds = array<i64: 8, 256>}, {pipeline_mode = #tpu.pipeline_mode<synchronous>, transform_indices = @transform_1, window_bounds = array<i64: 256, 512>}, {pipeline_mode = #tpu.pipeline_mode<synchronous>, transform_indices = @transform_2, window_bounds = array<i64: 128, 128>}, {pipeline_mode = #tpu.pipeline_mode<synchronous>, transform_indices = @transform_3, window_bounds = array<i64: 1, 512>}, {transform_indices = @transform_4, window_bounds = array<i64: 8, 128>}]} {
    %c0 = arith.constant 0 : index
    %c0_0 = arith.constant 0 : index
    %0 = vector.load %arg1[%c0, %c0_0] : memref<8x256xf32, #tpu.memory_space<vmem>>, vector<8x256xf32>
    %1 = vector.extract_strided_slice %0 {offsets = [0, 128], sizes = [8, 128], strides = [1, 1]} : vector<8x256xf32> to vector<8x128xf32>
    %c0_1 = arith.constant 0 : index
    %c0_2 = arith.constant 0 : index
    %2 = vector.load %arg2[%c0_1, %c0_2] : memref<256x512xf32, #tpu.memory_space<vmem>>, vector<256x512xf32>
    %cst = arith.constant dense<0.000000e+00> : vector<8x512xf32>
    %3 = tpu.matmul %0, %2, %cst {dimension_numbers = #tpu.dot_dimension_numbers<[1], [0], [0], [1], [0, 0, 1, 1], [], []>} : vector<8x256xf32>, vector<256x512xf32>, vector<8x512xf32> -> vector<8x512xf32>
    %c0_3 = arith.constant 0 : index
    %c0_4 = arith.constant 0 : index
    %4 = vector.load %arg4[%c0_3, %c0_4] : memref<1x512xf32, #tpu.memory_space<vmem>>, vector<1x512xf32>
    %5 = vector.broadcast %4 : vector<1x512xf32> to vector<8x512xf32>
    %6 = arith.addf %3, %5 : vector<8x512xf32>
    %7 = vector.extract_strided_slice %6 {offsets = [0, 0], sizes = [8, 384], strides = [1, 1]} : vector<8x512xf32> to vector<8x384xf32>
    %8 = math.tanh %7 : vector<8x384xf32>
    %9 = vector.extract_strided_slice %8 {offsets = [0, 0], sizes = [8, 128], strides = [1, 1]} : vector<8x384xf32> to vector<8x128xf32>
    %10 = vector.extract_strided_slice %8 {offsets = [0, 128], sizes = [8, 128], strides = [1, 1]} : vector<8x384xf32> to vector<8x128xf32>
    %11 = vector.extract_strided_slice %8 {offsets = [0, 256], sizes = [8, 128], strides = [1, 1]} : vector<8x384xf32> to vector<8x128xf32>
    %12 = arith.mulf %1, %11 : vector<8x128xf32>
    %13 = vector.extract_strided_slice %6 {offsets = [0, 384], sizes = [8, 128], strides = [1, 1]} : vector<8x512xf32> to vector<8x128xf32>
    %c0_5 = arith.constant 0 : index
    %c0_6 = arith.constant 0 : index
    %14 = vector.load %arg3[%c0_5, %c0_6] : memref<128x128xf32, #tpu.memory_space<vmem>>, vector<128x128xf32>
    %cst_7 = arith.constant dense<0.000000e+00> : vector<8x128xf32>
    %15 = tpu.matmul %12, %14, %cst_7 {dimension_numbers = #tpu.dot_dimension_numbers<[1], [0], [0], [1], [0, 0, 1, 1], [], []>} : vector<8x128xf32>, vector<128x128xf32>, vector<8x128xf32> -> vector<8x128xf32>
    %16 = arith.addf %13, %15 : vector<8x128xf32>
    %17 = math.tanh %16 : vector<8x128xf32>
    %cst_8 = arith.constant 1.000000e+00 : f32
    %18 = vector.broadcast %cst_8 : f32 to vector<8x128xf32>
    %19 = arith.subf %18, %10 : vector<8x128xf32>
    %20 = arith.mulf %19, %17 : vector<8x128xf32>
    %21 = arith.mulf %9, %1 : vector<8x128xf32>
    %22 = arith.addf %20, %21 : vector<8x128xf32>
    %c0_9 = arith.constant 0 : index
    %c0_10 = arith.constant 0 : index
    %23 = vector.load %arg5[%c0_9, %c0_10] : memref<8x128xf32, #tpu.memory_space<vmem>>, vector<8x128xf32>
    tpu.vector_store %arg5[%c0_9, %c0_10], %22 {strides = array<i32>} : memref<8x128xf32, #tpu.memory_space<vmem>>, vector<8x128xf32>,
    return
  }
  func.func @transform_0(%arg0: i32) -> (i32, i32) {
    %c0_i32 = arith.constant 0 : i32
    %c0_i32_0 = arith.constant 0 : i32
    return %arg0, %c0_i32 : i32, i32
  }
  func.func @transform_1(%arg0: i32) -> (i32, i32) {
    %c0_i32 = arith.constant 0 : i32
    %c0_i32_0 = arith.constant 0 : i32
    %c0_i32_1 = arith.constant 0 : i32
    return %c0_i32, %c0_i32_0 : i32, i32
  }
  func.func @transform_2(%arg0: i32) -> (i32, i32) {
    %c0_i32 = arith.constant 0 : i32
    %c0_i32_0 = arith.constant 0 : i32
    %c0_i32_1 = arith.constant 0 : i32
    return %c0_i32, %c0_i32_0 : i32, i32
  }
  func.func @transform_3(%arg0: i32) -> (i32, i32) {
    %c0_i32 = arith.constant 0 : i32
    %c0_i32_0 = arith.constant 0 : i32
    %c0_i32_1 = arith.constant 0 : i32
    return %c0_i32, %c0_i32_0 : i32, i32
  }
  func.func @transform_4(%arg0: i32) -> (i32, i32) {
    %c0_i32 = arith.constant 0 : i32
    %c0_i32_0 = arith.constant 0 : i32
    return %arg0, %c0_i32 : i32, i32
  }
}

</mosaic_0001>

<llo_original>
// kernel: dgm_lstm_forward.1
$region0: #{dgm_lstm_forward.1}
  #allocation0 [shape = 'u32[]', space=smem, size = 0x4, offset = 0x4, fixed_abs, tag = 'smem constant byte address 0x4 - core index']
  #allocation1 [shape = 'u32[144,128]{1,0:T(1,128)}', space=vmem, size = 0x12000, scoped, tag = 'internal scratch']
  %s0 = inlined_call_operand.vmem [shape: f32[8,256], index: 0, kind: input, shape index: {}]
  %s1 = inlined_call_operand.vmem [shape: f32[256,512], index: 1, kind: input, shape index: {}]
  %s2 = inlined_call_operand.vmem [shape: f32[128,128], index: 2, kind: input, shape index: {}]
  %s3 = inlined_call_operand.vmem [shape: f32[1,512], index: 3, kind: input, shape index: {}]
  %s4 = inlined_call_operand.hbm [shape: f32[8,128], index: 4, kind: output, shape index: {}]
  %s5 = sld [smem:[#allocation0]]
  $region26: #{dgm_lstm_forward.1} parent=0
    _
  %s7 = ssub.s32 1, %s5
  %s8 = scalar_select 0, %s7, %s5
  $region1: #{dgm_lstm_forward.1} parent=0
    #allocation2 [shape = 'u8[4096]{0}', space=vmem, size = 0x1000, scoped, tag = 'output window, operand 0, single buffered']
    #allocation3 [shape = 's32[1]{0}', space=sflag, size = 0x4, scoped, tag = 'scoped memory for dgm_lstm_forward.1']
    %9 = vsyncpa [#allocation3], 0
    // Predicated region
    $region2: #{dgm_lstm_forward.1} parent=1 // pred_check
      _
    $region3: #{dgm_lstm_forward.1} parent=1 // pred_check_branch
      %11 = sbr.rel (0) target = $region5
    $region4: #{dgm_lstm_forward.1} parent=1 // pred_region
      _
    $region5: #{dgm_lstm_forward.1} parent=1 // pred_fallthru
      _
    // Predicated region
    $region6: #{dgm_lstm_forward.1} parent=1 // pred_check
      _
    $region7: #{dgm_lstm_forward.1} parent=1 // pred_check_branch
      %13 = sbr.rel (0) target = $region9
    $region8: #{dgm_lstm_forward.1} parent=1 // pred_region
      _
    $region9: #{dgm_lstm_forward.1} parent=1 // pred_fallthru
      _
    // Predicated region
    $region10: #{dgm_lstm_forward.1} parent=1 // pred_check
      _
    $region11: #{dgm_lstm_forward.1} parent=1 // pred_check_branch
      %15 = sbr.rel (0) target = $region13
    $region12: #{dgm_lstm_forward.1} parent=1 // pred_region
      _
    $region13: #{dgm_lstm_forward.1} parent=1 // pred_fallthru
      _
    // Predicated region
    $region14: #{dgm_lstm_forward.1} parent=1 // pred_check
      _
    $region15: #{dgm_lstm_forward.1} parent=1 // pred_check_branch
      %17 = sbr.rel (0) target = $region17
    $region16: #{dgm_lstm_forward.1} parent=1 // pred_region
      _
    $region17: #{dgm_lstm_forward.1} parent=1 // pred_fallthru
      _
    %v18 = vld [vmem:[%s0] sm:$0xff]
    %v19 = vld [vmem:[%s0 + $0x8] sm:$0xff]
    %v20 = vld [vmem:[%s1] sm:$0xff]
    %v21 = vld [vmem:[%s1 + $0x8] sm:$0xff]
    %v22 = vld [vmem:[%s1 + $0x10] sm:$0xff]
    %v23 = vld [vmem:[%s1 + $0x18] sm:$0xff]
    %v24 = vld [vmem:[%s1 + $0x20] sm:$0xff]
    %v25 = vld [vmem:[%s1 + $0x28] sm:$0xff]
    %v26 = vld [vmem:[%s1 + $0x30] sm:$0xff]
    %v27 = vld [vmem:[%s1 + $0x38] sm:$0xff]
    %v28 = vld [vmem:[%s1 + $0x40] sm:$0xff]
    %v29 = vld [vmem:[%s1 + $0x48] sm:$0xff]
    %v30 = vld [vmem:[%s1 + $0x50] sm:$0xff]
    %v31 = vld [vmem:[%s1 + $0x58] sm:$0xff]
    %v32 = vld [vmem:[%s1 + $0x60] sm:$0xff]
    %v33 = vld [vmem:[%s1 + $0x68] sm:$0xff]
    %v34 = vld [vmem:[%s1 + $0x70] sm:$0xff]
    %v35 = vld [vmem:[%s1 + $0x78] sm:$0xff]
    %v36 = vld [vmem:[%s1 + $0x80] sm:$0xff]
    %v37 = vld [vmem:[%s1 + $0x88] sm:$0xff]
    %v38 = vld [vmem:[%s1 + $0x90] sm:$0xff]
    %v39 = vld [vmem:[%s1 + $0x98] sm:$0xff]
    %v40 = vld [vmem:[%s1 + $0xa0] sm:$0xff]
    %v41 = vld [vmem:[%s1 + $0xa8] sm:$0xff]
    %v42 = vld [vmem:[%s1 + $0xb0] sm:$0xff]
    %v43 = vld [vmem:[%s1 + $0xb8] sm:$0xff]
    %v44 = vld [vmem:[%s1 + $0xc0] sm:$0xff]
    %v45 = vld [vmem:[%s1 + $0xc8] sm:$0xff]
    %v46 = vld [vmem:[%s1 + $0xd0] sm:$0xff]
    %v47 = vld [vmem:[%s1 + $0xd8] sm:$0xff]
    %v48 = vld [vmem:[%s1 + $0xe0] sm:$0xff]
    %v49 = vld [vmem:[%s1 + $0xe8] sm:$0xff]
    %v50 = vld [vmem:[%s1 + $0xf0] sm:$0xff]
    %v51 = vld [vmem:[%s1 + $0xf8] sm:$0xff]
    %v52 = vld [vmem:[%s1 + $0x100] sm:$0xff]
    %v53 = vld [vmem:[%s1 + $0x108] sm:$0xff]
    %v54 = vld [vmem:[%s1 + $0x110] sm:$0xff]
    %v55 = vld [vmem:[%s1 + $0x118] sm:$0xff]
    %v56 = vld [vmem:[%s1 + $0x120] sm:$0xff]
    %v57 = vld [vmem:[%s1 + $0x128] sm:$0xff]
    %v58 = vld [vmem:[%s1 + $0x130] sm:$0xff]
    %v59 = vld [vmem:[%s1 + $0x138] sm:$0xff]
    %v60 = vld [vmem:[%s1 + $0x140] sm:$0xff]
    %v61 = vld [vmem:[%s1 + $0x148] sm:$0xff]
    %v62 = vld [vmem:[%s1 + $0x150] sm:$0xff]
    %v63 = vld [vmem:[%s1 + $0x158] sm:$0xff]
    %v64 = vld [vmem:[%s1 + $0x160] sm:$0xff]
    %v65 = vld [vmem:[%s1 + $0x168] sm:$0xff]
    %v66 = vld [vmem:[%s1 + $0x170] sm:$0xff]
    %v67 = vld [vmem:[%s1 + $0x178] sm:$0xff]
    %v68 = vld [vmem:[%s1 + $0x180] sm:$0xff]
    %v69 = vld [vmem:[%s1 + $0x188] sm:$0xff]
    %v70 = vld [vmem:[%s1 + $0x190] sm:$0xff]
    %v71 = vld [vmem:[%s1 + $0x198] sm:$0xff]
    %v72 = vld [vmem:[%s1 + $0x1a0] sm:$0xff]
    %v73 = vld [vmem:[%s1 + $0x1a8] sm:$0xff]
    %v74 = vld [vmem:[%s1 + $0x1b0] sm:$0xff]
    %v75 = vld [vmem:[%s1 + $0x1b8] sm:$0xff]
    %v76 = vld [vmem:[%s1 + $0x1c0] sm:$0xff]
    %v77 = vld [vmem:[%s1 + $0x1c8] sm:$0xff]
    %v78 = vld [vmem:[%s1 + $0x1d0] sm:$0xff]
    %v79 = vld [vmem:[%s1 + $0x1d8] sm:$0xff]
    %v80 = vld [vmem:[%s1 + $0x1e0] sm:$0xff]
    %v81 = vld [vmem:[%s1 + $0x1e8] sm:$0xff]
    %v82 = vld [vmem:[%s1 + $0x1f0] sm:$0xff]
    %v83 = vld [vmem:[%s1 + $0x1f8] sm:$0xff]
    %v84 = vld [vmem:[%s1 + $0x200] sm:$0xff]
    %v85 = vld [vmem:[%s1 + $0x208] sm:$0xff]
    %v86 = vld [vmem:[%s1 + $0x210] sm:$0xff]
    %v87 = vld [vmem:[%s1 + $0x218] sm:$0xff]
    %v88 = vld [vmem:[%s1 + $0x220] sm:$0xff]
    %v89 = vld [vmem:[%s1 + $0x228] sm:$0xff]
    %v90 = vld [vmem:[%s1 + $0x230] sm:$0xff]
    %v91 = vld [vmem:[%s1 + $0x238] sm:$0xff]
    %v92 = vld [vmem:[%s1 + $0x240] sm:$0xff]
    %v93 = vld [vmem:[%s1 + $0x248] sm:$0xff]
    %v94 = vld [vmem:[%s1 + $0x250] sm:$0xff]
    %v95 = vld [vmem:[%s1 + $0x258] sm:$0xff]
    %v96 = vld [vmem:[%s1 + $0x260] sm:$0xff]
    %v97 = vld [vmem:[%s1 + $0x268] sm:$0xff]
    %v98 = vld [vmem:[%s1 + $0x270] sm:$0xff]
    %v99 = vld [vmem:[%s1 + $0x278] sm:$0xff]
    %v100 = vld [vmem:[%s1 + $0x280] sm:$0xff]
    %v101 = vld [vmem:[%s1 + $0x288] sm:$0xff]
    %v102 = vld [vmem:[%s1 + $0x290] sm:$0xff]
    %v103 = vld [vmem:[%s1 + $0x298] sm:$0xff]
    %v104 = vld [vmem:[%s1 + $0x2a0] sm:$0xff]
    %v105 = vld [vmem:[%s1 + $0x2a8] sm:$0xff]
    %v106 = vld [vmem:[%s1 + $0x2b0] sm:$0xff]
    %v107 = vld [vmem:[%s1 + $0x2b8] sm:$0xff]
    %v108 = vld [vmem:[%s1 + $0x2c0] sm:$0xff]
    %v109 = vld [vmem:[%s1 + $0x2c8] sm:$0xff]
    %v110 = vld [vmem:[%s1 + $0x2d0] sm:$0xff]
    %v111 = vld [vmem:[%s1 + $0x2d8] sm:$0xff]
    %v112 = vld [vmem:[%s1 + $0x2e0] sm:$0xff]
    %v113 = vld [vmem:[%s1 + $0x2e8] sm:$0xff]
    %v114 = vld [vmem:[%s1 + $0x2f0] sm:$0xff]
    %v115 = vld [vmem:[%s1 + $0x2f8] sm:$0xff]
    %v116 = vld [vmem:[%s1 + $0x300] sm:$0xff]
    %v117 = vld [vmem:[%s1 + $0x308] sm:$0xff]
    %v118 = vld [vmem:[%s1 + $0x310] sm:$0xff]
    %v119 = vld [vmem:[%s1 + $0x318] sm:$0xff]
    %v120 = vld [vmem:[%s1 + $0x320] sm:$0xff]
    %v121 = vld [vmem:[%s1 + $0x328] sm:$0xff]
    %v122 = vld [vmem:[%s1 + $0x330] sm:$0xff]
    %v123 = vld [vmem:[%s1 + $0x338] sm:$0xff]
    %v124 = vld [vmem:[%s1 + $0x340] sm:$0xff]
    %v125 = vld [vmem:[%s1 + $0x348] sm:$0xff]
    %v126 = vld [vmem:[%s1 + $0x350] sm:$0xff]
    %v127 = vld [vmem:[%s1 + $0x358] sm:$0xff]
    %v128 = vld [vmem:[%s1 + $0x360] sm:$0xff]
    %v129 = vld [vmem:[%s1 + $0x368] sm:$0xff]
    %v130 = vld [vmem:[%s1 + $0x370] sm:$0xff]
    %v131 = vld [vmem:[%s1 + $0x378] sm:$0xff]
    %v132 = vld [vmem:[%s1 + $0x380] sm:$0xff]
    %v133 = vld [vmem:[%s1 + $0x388] sm:$0xff]
    %v134 = vld [vmem:[%s1 + $0x390] sm:$0xff]
    %v135 = vld [vmem:[%s1 + $0x398] sm:$0xff]
    %v136 = vld [vmem:[%s1 + $0x3a0] sm:$0xff]
    %v137 = vld [vmem:[%s1 + $0x3a8] sm:$0xff]
    %v138 = vld [vmem:[%s1 + $0x3b0] sm:$0xff]
    %v139 = vld [vmem:[%s1 + $0x3b8] sm:$0xff]
    %v140 = vld [vmem:[%s1 + $0x3c0] sm:$0xff]
    %v141 = vld [vmem:[%s1 + $0x3c8] sm:$0xff]
    %v142 = vld [vmem:[%s1 + $0x3d0] sm:$0xff]
    %v143 = vld [vmem:[%s1 + $0x3d8] sm:$0xff]
    %v144 = vld [vmem:[%s1 + $0x3e0] sm:$0xff]
    %v145 = vld [vmem:[%s1 + $0x3e8] sm:$0xff]
    %v146 = vld [vmem:[%s1 + $0x3f0] sm:$0xff]
    %v147 = vld [vmem:[%s1 + $0x3f8] sm:$0xff]
    %v148 = vld [vmem:[%s3] sm:$0xf]
    %v150 = vlaneseq
    %v151 = vshrl.u32 %v150, 7
    %v152 = vsub.s32 0, %v151
    %v153 = vrot.slane %v148, %v152
    %v154 = vlaneseq
    %v155 = vshrl.u32 %v154, 7
    %v156 = vsub.s32 1, %v155
    %v157 = vrot.slane %v148, %v156
    %v158 = vlaneseq
    %v159 = vshrl.u32 %v158, 7
    %v160 = vsub.s32 2, %v159
    %v161 = vrot.slane %v148, %v160
    %v162 = vlaneseq
    %v163 = vshrl.u32 %v162, 7
    %v164 = vsub.s32 3, %v163
    %v165 = vrot.slane %v148, %v164
    %170 = vmatprep.subr.mxu0 %v81
    %171 = vmatpush1.msra.mxu0 %v80
    %172 = vmatprep.subr.mxu0 %v77
    %173 = vmatpush1.msra.mxu0 %v76
    %174 = vmatprep.subr.mxu0 %v73
    %175 = vmatpush1.msra.mxu0 %v72
    %176 = vmatprep.subr.mxu0 %v69
    %177 = vmatpush1.msra.mxu0 %v68
    %178 = vmatprep.subr.mxu0 %v65
    %179 = vmatpush1.msra.mxu0 %v64
    %180 = vmatprep.subr.mxu0 %v61
    %181 = vmatpush1.msra.mxu0 %v60
    %182 = vmatprep.subr.mxu0 %v57
    %183 = vmatpush1.msra.mxu0 %v56
    %184 = vmatprep.subr.mxu0 %v53
    %185 = vmatpush1.msra.mxu0 %v52
    %186 = vmatprep.subr.mxu0 %v49
    %187 = vmatpush1.msra.mxu0 %v48
    %188 = vmatprep.subr.mxu0 %v45
    %189 = vmatpush1.msra.mxu0 %v44
    %190 = vmatprep.subr.mxu0 %v41
    %191 = vmatpush1.msra.mxu0 %v40
    %192 = vmatprep.subr.mxu0 %v37
    %193 = vmatpush1.msra.mxu0 %v36
    %194 = vmatprep.subr.mxu0 %v33
    %195 = vmatpush1.msra.mxu0 %v32
    %196 = vmatprep.subr.mxu0 %v29
    %197 = vmatpush1.msra.mxu0 %v28
    %198 = vmatprep.subr.mxu0 %v25
    %199 = vmatpush1.msra.mxu0 %v24
    %200 = vmatprep.subr.mxu0 %v21
    %201 = vmatpush1.msra.mxu0 %v20
    %202 = vmatprep.subr.mxu0 %v145
    %203 = vmatpush2.msra.mxu0 %v144
    %204 = vmatprep.subr.mxu0 %v141
    %205 = vmatpush2.msra.mxu0 %v140
    %206 = vmatprep.subr.mxu0 %v137
    %207 = vmatpush2.msra.mxu0 %v136
    %208 = vmatprep.subr.mxu0 %v133
    %209 = vmatpush2.msra.mxu0 %v132
    %210 = vmatprep.subr.mxu0 %v129
    %211 = vmatpush2.msra.mxu0 %v128
    %212 = vmatprep.subr.mxu0 %v125
    %213 = vmatpush2.msra.mxu0 %v124
    %214 = vmatprep.subr.mxu0 %v121
    %215 = vmatpush2.msra.mxu0 %v120
    %216 = vmatprep.subr.mxu0 %v117
    %217 = vmatpush2.msra.mxu0 %v116
    %218 = vmatprep.subr.mxu0 %v113
    %219 = vmatpush2.msra.mxu0 %v112
    %220 = vmatprep.subr.mxu0 %v109
    %221 = vmatpush2.msra.mxu0 %v108
    %222 = vmatprep.subr.mxu0 %v105
    %223 = vmatpush2.msra.mxu0 %v104
    %224 = vmatprep.subr.mxu0 %v101
    %225 = vmatpush2.msra.mxu0 %v100
    %226 = vmatprep.subr.mxu0 %v97
    %227 = vmatpush2.msra.mxu0 %v96
    %228 = vmatprep.subr.mxu0 %v93
    %229 = vmatpush2.msra.mxu0 %v92
    %230 = vmatprep.subr.mxu0 %v89
    %231 = vmatpush2.msra.mxu0 %v88
    %232 = vmatprep.subr.mxu0 %v85
    %233 = vmatpush2.msra.mxu0 %v84
    %234 = vmatprep.mubr.f32.mxu0 %v19
    %235 = vmatmul.mubr.f32.gmra.mxu0 %v18
    %v236 = vpop.f32.mrf.mxu0
    %v237 = vadd.f32 %v153, %v236
    %v238 = vpop.f32.mrf.mxu0
    %v239 = vadd.f32 %v157, %v238
    %240 = vdwg.mxu0
    %241 = vmatprep.subr.mxu0 %v83
    %242 = vmatpush1.msra.mxu0 %v82
    %243 = vmatprep.subr.mxu0 %v79
    %244 = vmatpush1.msra.mxu0 %v78
    %245 = vmatprep.subr.mxu0 %v75
    %246 = vmatpush1.msra.mxu0 %v74
    %247 = vmatprep.subr.mxu0 %v71
    %248 = vmatpush1.msra.mxu0 %v70
    %249 = vmatprep.subr.mxu0 %v67
    %250 = vmatpush1.msra.mxu0 %v66
    %251 = vmatprep.subr.mxu0 %v63
    %252 = vmatpush1.msra.mxu0 %v62
    %253 = vmatprep.subr.mxu0 %v59
    %254 = vmatpush1.msra.mxu0 %v58
    %255 = vmatprep.subr.mxu0 %v55
    %256 = vmatpush1.msra.mxu0 %v54
    %257 = vmatprep.subr.mxu0 %v51
    %258 = vmatpush1.msra.mxu0 %v50
    %259 = vmatprep.subr.mxu0 %v47
    %260 = vmatpush1.msra.mxu0 %v46
    %261 = vmatprep.subr.mxu0 %v43
    %262 = vmatpush1.msra.mxu0 %v42
    %263 = vmatprep.subr.mxu0 %v39
    %264 = vmatpush1.msra.mxu0 %v38
    %265 = vmatprep.subr.mxu0 %v35
    %266 = vmatpush1.msra.mxu0 %v34
    %267 = vmatprep.subr.mxu0 %v31
    %268 = vmatpush1.msra.mxu0 %v30
    %269 = vmatprep.subr.mxu0 %v27
    %270 = vmatpush1.msra.mxu0 %v26
    %271 = vmatprep.subr.mxu0 %v23
    %272 = vmatpush1.msra.mxu0 %v22
    %273 = vmatprep.subr.mxu0 %v147
    %274 = vmatpush2.msra.mxu0 %v146
    %275 = vmatprep.subr.mxu0 %v143
    %276 = vmatpush2.msra.mxu0 %v142
    %277 = vmatprep.subr.mxu0 %v139
    %278 = vmatpush2.msra.mxu0 %v138
    %279 = vmatprep.subr.mxu0 %v135
    %280 = vmatpush2.msra.mxu0 %v134
    %281 = vmatprep.subr.mxu0 %v131
    %282 = vmatpush2.msra.mxu0 %v130
    %283 = vmatprep.subr.mxu0 %v127
    %284 = vmatpush2.msra.mxu0 %v126
    %285 = vmatprep.subr.mxu0 %v123
    %286 = vmatpush2.msra.mxu0 %v122
    %287 = vmatprep.subr.mxu0 %v119
    %288 = vmatpush2.msra.mxu0 %v118
    %289 = vmatprep.subr.mxu0 %v115
    %290 = vmatpush2.msra.mxu0 %v114
    %291 = vmatprep.subr.mxu0 %v111
    %292 = vmatpush2.msra.mxu0 %v110
    %293 = vmatprep.subr.mxu0 %v107
    %294 = vmatpush2.msra.mxu0 %v106
    %295 = vmatprep.subr.mxu0 %v103
    %296 = vmatpush2.msra.mxu0 %v102
    %297 = vmatprep.subr.mxu0 %v99
    %298 = vmatpush2.msra.mxu0 %v98
    %299 = vmatprep.subr.mxu0 %v95
    %300 = vmatpush2.msra.mxu0 %v94
    %301 = vmatprep.subr.mxu0 %v91
    %302 = vmatpush2.msra.mxu0 %v90
    %303 = vmatprep.subr.mxu0 %v87
    %304 = vmatpush2.msra.mxu0 %v86
    %305 = vmatprep.mubr.f32.mxu0 %v19
    %306 = vmatmul.mubr.f32.gmra.mxu0 %v18
    %v307 = vpop.f32.mrf.mxu0
    %v308 = vadd.f32 %v161, %v307
    %v309 = vpop.f32.mrf.mxu0
    %v310 = vadd.f32 %v165, %v309
    %311 = vdwg.mxu0
    %v312 = vtanh.pop %v237
    %v313 = vtanh.pop %v239
    %v314 = vtanh.pop %v308
    %v315 = vmul.f32 %v19, %v314
    %v316 = vld [vmem:[%s2] sm:$0xff]
    %v317 = vld [vmem:[%s2 + $0x8] sm:$0xff]
    %v318 = vld [vmem:[%s2 + $0x10] sm:$0xff]
    %v319 = vld [vmem:[%s2 + $0x18] sm:$0xff]
    %v320 = vld [vmem:[%s2 + $0x20] sm:$0xff]
    %v321 = vld [vmem:[%s2 + $0x28] sm:$0xff]
    %v322 = vld [vmem:[%s2 + $0x30] sm:$0xff]
    %v323 = vld [vmem:[%s2 + $0x38] sm:$0xff]
    %v324 = vld [vmem:[%s2 + $0x40] sm:$0xff]
    %v325 = vld [vmem:[%s2 + $0x48] sm:$0xff]
    %v326 = vld [vmem:[%s2 + $0x50] sm:$0xff]
    %v327 = vld [vmem:[%s2 + $0x58] sm:$0xff]
    %v328 = vld [vmem:[%s2 + $0x60] sm:$0xff]
    %v329 = vld [vmem:[%s2 + $0x68] sm:$0xff]
    %v330 = vld [vmem:[%s2 + $0x70] sm:$0xff]
    %v331 = vld [vmem:[%s2 + $0x78] sm:$0xff]
    %332 = vmatprep.subr.mxu0 0.0
    %333 = vmatpush1.msra.mxu0 %v331
    %334 = vmatprep.subr.mxu0 0.0
    %335 = vmatpush1.msra.mxu0 %v330
    %336 = vmatprep.subr.mxu0 0.0
    %337 = vmatpush1.msra.mxu0 %v329
    %338 = vmatprep.subr.mxu0 0.0
    %339 = vmatpush1.msra.mxu0 %v328
    %340 = vmatprep.subr.mxu0 0.0
    %341 = vmatpush1.msra.mxu0 %v327
    %342 = vmatprep.subr.mxu0 0.0
    %343 = vmatpush1.msra.mxu0 %v326
    %344 = vmatprep.subr.mxu0 0.0
    %345 = vmatpush1.msra.mxu0 %v325
    %346 = vmatprep.subr.mxu0 0.0
    %347 = vmatpush1.msra.mxu0 %v324
    %348 = vmatprep.subr.mxu0 0.0
    %349 = vmatpush1.msra.mxu0 %v323
    %350 = vmatprep.subr.mxu0 0.0
    %351 = vmatpush1.msra.mxu0 %v322
    %352 = vmatprep.subr.mxu0 0.0
    %353 = vmatpush1.msra.mxu0 %v321
    %354 = vmatprep.subr.mxu0 0.0
    %355 = vmatpush1.msra.mxu0 %v320
    %356 = vmatprep.subr.mxu0 0.0
    %357 = vmatpush1.msra.mxu0 %v319
    %358 = vmatprep.subr.mxu0 0.0
    %359 = vmatpush1.msra.mxu0 %v318
    %360 = vmatprep.subr.mxu0 0.0
    %361 = vmatpush1.msra.mxu0 %v317
    %362 = vmatprep.subr.mxu0 0.0
    %363 = vmatpush1.msra.mxu0 %v316
    %364 = vmatprep.subr.mxu0 0.0
    %365 = vmatpush2.msra.mxu0 0.0
    %366 = vmatprep.subr.mxu0 0.0
    %367 = vmatpush2.msra.mxu0 0.0
    %368 = vmatprep.subr.mxu0 0.0
    %369 = vmatpush2.msra.mxu0 0.0
    %370 = vmatprep.subr.mxu0 0.0
    %371 = vmatpush2.msra.mxu0 0.0
    %372 = vmatprep.subr.mxu0 0.0
    %373 = vmatpush2.msra.mxu0 0.0
    %374 = vmatprep.subr.mxu0 0.0
    %375 = vmatpush2.msra.mxu0 0.0
    %376 = vmatprep.subr.mxu0 0.0
    %377 = vmatpush2.msra.mxu0 0.0
    %378 = vmatprep.subr.mxu0 0.0
    %379 = vmatpush2.msra.mxu0 0.0
    %380 = vmatprep.subr.mxu0 0.0
    %381 = vmatpush2.msra.mxu0 0.0
    %382 = vmatprep.subr.mxu0 0.0
    %383 = vmatpush2.msra.mxu0 0.0
    %384 = vmatprep.subr.mxu0 0.0
    %385 = vmatpush2.msra.mxu0 0.0
    %386 = vmatprep.subr.mxu0 0.0
    %387 = vmatpush2.msra.mxu0 0.0
    %388 = vmatprep.subr.mxu0 0.0
    %389 = vmatpush2.msra.mxu0 0.0
    %390 = vmatprep.subr.mxu0 0.0
    %391 = vmatpush2.msra.mxu0 0.0
    %392 = vmatprep.subr.mxu0 0.0
    %393 = vmatpush2.msra.mxu0 0.0
    %394 = vmatprep.subr.mxu0 0.0
    %395 = vmatpush2.msra.mxu0 0.0
    %396 = vmatprep.mubr.f32.mxu0 0.0
    %397 = vmatmul.mubr.f32.gmra.mxu0 %v315
    %v398 = vpop.f32.mrf.mxu0
    %v399 = vadd.f32 0.0, %v398
    %v400 = vpop.f32.mrf.mxu0
    %401 = vdwg.mxu0
    %v402 = vadd.f32 %v310, %v399
    %v403 = vtanh.pop %v402
    %v404 = vsub.f32 1.0, %v313
    %v405 = vmul.f32 %v404, %v403
    %v406 = vmul.f32 %v312, %v19
    %v407 = vadd.f32 %v405, %v406
    %408 = vst [vmem:[#allocation2] sm:$0xff] %v407
    // Predicated region
    $region18: #{dgm_lstm_forward.1} parent=1 // pred_check
      _
    $region19: #{dgm_lstm_forward.1} parent=1 // pred_check_branch
      %410 = sbr.rel (0) target = $region21
    $region20: #{dgm_lstm_forward.1} parent=1 // pred_region
      %s412 = ssub.s32 128, 128
      %413 = vsyncadd [#allocation3], %s412
      %s415 = sshll.u32 [#allocation2], 4
      %s416 = int_to_ptr.vmem [resolvable:$true] %s415
      %418 = dma.vmem_to_hbm [thread:$0]  %s416, 128, %s4, [#allocation3]
    $region21: #{dgm_lstm_forward.1} parent=1 // pred_fallthru
      _
    // Predicated region
    $region22: #{dgm_lstm_forward.1} parent=1 // pred_check
      _
    $region23: #{dgm_lstm_forward.1} parent=1 // pred_check_branch
      %420 = sbr.rel (0) target = $region25
    $region24: #{dgm_lstm_forward.1} parent=1 // pred_region
      %421 = dma.done [#allocation3], 128
    $region25: #{dgm_lstm_forward.1} parent=1 // pred_fallthru
      _
    %422 = vsyncpa [#allocation3], 1

</llo_original>
